<compile_context>
chip_gen: v6e
topology: v6e:2x2x1
jax: 0.10.0
libtpu: 0.0.40
codegen_flags: <defaults>
</compile_context>

<pallas_src>
import functools

import jax
import jax.numpy as jnp
from jax import lax
from jax.experimental import pallas as pl
from jax.experimental.pallas import tpu as pltpu

BN_EPS = 1e-5
LANE = 128


def _round_up(x, m):
    return ((x + m - 1) // m) * m


def _gemm_relu_stats_kernel(p_ref, w_ref, b_ref, y_ref, sum_ref, sq_ref, *,
                            block_rows, true_rows):
    """Pass 1: Y = relu(P @ W + b) for this row tile; accumulate per-channel
    sum / sum-of-squares (padded rows excluded from the stats)."""
    @pl.when(pl.program_id(0) == 0)
    def _init():
        sum_ref[...] = jnp.zeros_like(sum_ref)
        sq_ref[...] = jnp.zeros_like(sq_ref)

    y = jnp.dot(p_ref[...], w_ref[...], preferred_element_type=jnp.float32)
    y = jnp.maximum(y + b_ref[...], 0.0)
    y_ref[...] = y.astype(y_ref.dtype)

    # Mask rows that are padding of the row dimension out of the BN statistics.
    row0 = pl.program_id(0) * block_rows
    rid = row0 + lax.broadcasted_iota(jnp.int32, (block_rows, 1), 0)
    ym = jnp.where(rid < true_rows, y, 0.0)
    sum_ref[...] += jnp.sum(ym, axis=0, keepdims=True)
    sq_ref[...] += jnp.sum(ym * ym, axis=0, keepdims=True)


def _bn_apply_kernel(y_ref, sum_ref, sq_ref, gamma_ref, beta_ref, o_ref, *,
                     inv_rows):
    """Pass 2: BN folded to a single multiply-add per element."""
    mean = sum_ref[...] * inv_rows
    var = jnp.maximum(sq_ref[...] * inv_rows - mean * mean, 0.0)
    scale = gamma_ref[...] * lax.rsqrt(var + BN_EPS)
    shift = beta_ref[...] - mean * scale
    o_ref[...] = (y_ref[...] * scale + shift).astype(o_ref.dtype)


def _im2col(x, k, padding, dilation, stride):
    # x: NCHW float32 -> P: [N*Ho*Wo, C_in*K*K]
    n, c, h, w = x.shape
    xp = jnp.pad(x, ((0, 0), (0, 0), (padding, padding), (padding, padding)))
    ho = (h + 2 * padding - dilation * (k - 1) - 1) // stride + 1
    wo = (w + 2 * padding - dilation * (k - 1) - 1) // stride + 1
    patches = []
    for i in range(k):
        for j in range(k):
            patches.append(
                xp[:, :,
                   i * dilation:i * dilation + stride * ho:stride,
                   j * dilation:j * dilation + stride * wo:stride])
    # (N, C, K*K, Ho, Wo) -> (N, Ho, Wo, C, K*K) -> (N*Ho*Wo, C*K*K)
    p = jnp.stack(patches, axis=2)
    p = p.transpose(0, 3, 4, 1, 2).reshape(n * ho * wo, c * k * k)
    return p, ho, wo


@functools.partial(
    jax.jit,
    static_argnames=("kernel_size", "padding", "dilation", "stride", "block_rows"))
def conv2d_relu_bn(x, weight, bias, gamma, beta, *, kernel_size, padding,
                   dilation, stride=1, block_rows=512):
    """Forward pass of Conv2DReLUBN.  x: [N, C_in, H, W]  (NCHW, float32)."""
    n, c_in, _, _ = x.shape
    c_out = weight.shape[0]
    k = kernel_size

    p, ho, wo = _im2col(x, k, padding, dilation, stride)   # [rows, CK]
    rows, ck = p.shape

    # Lane-dense output: pad channel dim to a multiple of 128.
    co_pad = _round_up(c_out, LANE)
    # Row tile: multiple of 8 sublanes, clamped to the (padded) problem size.
    tr = _round_up(max(8, min(block_rows, _round_up(rows, 8))), 8)
    rows_pad = _round_up(rows, tr)
    n_tiles = rows_pad // tr

    f32 = jnp.float32
    p_pad = jnp.pad(p.astype(f32), ((0, rows_pad - rows), (0, 0)))
    w_mat = weight.reshape(c_out, c_in * k * k).T            # [CK, C_out]
    w_pad = jnp.pad(w_mat.astype(f32), ((0, 0), (0, co_pad - c_out)))
    b_pad = jnp.pad(bias.reshape(1, c_out).astype(f32),
                    ((0, 0), (0, co_pad - c_out)))
    g_pad = jnp.pad(gamma.reshape(1, c_out).astype(f32),
                    ((0, 0), (0, co_pad - c_out)), constant_values=1.0)
    be_pad = jnp.pad(beta.reshape(1, c_out).astype(f32),
                     ((0, 0), (0, co_pad - c_out)))

    # ---- Pass 1: tiled GEMM + bias + ReLU + per-channel stats accumulation ----
    gemm_cost = pl.CostEstimate(
        flops=2 * rows_pad * ck * co_pad,
        transcendentals=0,
        bytes_accessed=4 * (rows_pad * ck + ck * co_pad + co_pad
                            + rows_pad * co_pad + 2 * co_pad))

    y2d, col_sum, col_sq = pl.pallas_call(
        functools.partial(_gemm_relu_stats_kernel,
                          block_rows=tr, true_rows=rows),
        out_shape=(
            jax.ShapeDtypeStruct((rows_pad, co_pad), f32),   # post-ReLU Y
            jax.ShapeDtypeStruct((1, co_pad), f32),          # sum_c
            jax.ShapeDtypeStruct((1, co_pad), f32),          # sumsq_c
        ),
        grid=(n_tiles,),
        in_specs=[
            pl.BlockSpec((tr, ck), lambda i: (i, 0)),        # P row tile
            pl.BlockSpec((ck, co_pad), lambda i: (0, 0)),    # W resident
            pl.BlockSpec((1, co_pad), lambda i: (0, 0)),     # bias resident
        ],
        out_specs=(
            pl.BlockSpec((tr, co_pad), lambda i: (i, 0)),    # Y row tile
            pl.BlockSpec((1, co_pad), lambda i: (0, 0)),     # sum accumulator
            pl.BlockSpec((1, co_pad), lambda i: (0, 0)),     # sumsq accumulator
        ),
        compiler_params=pltpu.CompilerParams(
            dimension_semantics=("arbitrary",)),             # accumulator axis
        cost_estimate=gemm_cost,
    )(p_pad, w_pad, b_pad)

    # ---- Pass 2: normalize (folded scale/shift FMA), rows split across cores ----
    bn_cost = pl.CostEstimate(
        flops=2 * rows_pad * co_pad,
        transcendentals=co_pad * n_tiles,
        bytes_accessed=4 * (2 * rows_pad * co_pad + 4 * co_pad))

    out2d = pl.pallas_call(
        functools.partial(_bn_apply_kernel, inv_rows=1.0 / rows),
        out_shape=jax.ShapeDtypeStruct((rows_pad, co_pad), f32),
        grid=(n_tiles,),
        in_specs=[
            pl.BlockSpec((tr, co_pad), lambda i: (i, 0)),    # Y row tile
            pl.BlockSpec((1, co_pad), lambda i: (0, 0)),     # sum
            pl.BlockSpec((1, co_pad), lambda i: (0, 0)),     # sumsq
            pl.BlockSpec((1, co_pad), lambda i: (0, 0)),     # gamma
            pl.BlockSpec((1, co_pad), lambda i: (0, 0)),     # beta
        ],
        out_specs=pl.BlockSpec((tr, co_pad), lambda i: (i, 0)),
        compiler_params=pltpu.CompilerParams(
            dimension_semantics=("parallel",)),
        cost_estimate=bn_cost,
    )(y2d, col_sum, col_sq, g_pad, be_pad)

    # Strip row / channel padding, return NCHW.
    out2d = out2d[:rows, :c_out]
    return out2d.reshape(n, ho, wo, c_out).transpose(0, 3, 1, 2)


def _reference(x, weight, bias, gamma, beta, *, padding, dilation, stride):
    """Pure-JAX reference matching PyTorch semantics (training-mode BN)."""
    y = lax.conv_general_dilated(
        x, weight,
        window_strides=(stride, stride),
        padding=((padding, padding), (padding, padding)),
        rhs_dilation=(dilation, dilation),
        dimension_numbers=("NCHW", "OIHW", "NCHW"))
    y = y + bias.reshape(1, -1, 1, 1)
    y = jnp.maximum(y, 0.0)
    mean = jnp.mean(y, axis=(0, 2, 3), keepdims=True)
    var = jnp.mean((y - mean) ** 2, axis=(0, 2, 3), keepdims=True)
    y = (y - mean) * lax.rsqrt(var + BN_EPS)
    return y * gamma.reshape(1, -1, 1, 1) + beta.reshape(1, -1, 1, 1)


if __name__ == "__main__":
    # Module config consistent with Conv2DReLUBN(in, width, k, pad, dil).
    N, C_IN, H, W = 2, 4, 16, 16
    C_OUT, K, PAD, DIL, STRIDE = 8, 3, 1, 1, 1

    key = jax.random.PRNGKey(0)
    kx, kw, kb = jax.random.split(key, 3)

    x = jax.random.normal(kx, (N, C_IN, H, W), dtype=jnp.float32)

    # Deterministic parameter init mirroring the PyTorch module:
    # kaiming_normal_(fan_in, relu): std = sqrt(2 / fan_in)
    fan_in = C_IN * K * K
    weight = jax.random.normal(kw, (C_OUT, C_IN, K, K), dtype=jnp.float32) * jnp.sqrt(2.0 / fan_in)
    # nn.Conv2d default bias init: U(-1/sqrt(fan_in), 1/sqrt(fan_in))
    bound = 1.0 / jnp.sqrt(fan_in)
    bias = jax.random.uniform(kb, (C_OUT,), dtype=jnp.float32, minval=-bound, maxval=bound)
    # BatchNorm2d default affine params.
    gamma = jnp.ones((C_OUT,), dtype=jnp.float32)
    beta = jnp.zeros((C_OUT,), dtype=jnp.float32)

    # block_rows=128 -> 4 row tiles here: exercises the multi-tile stats
    # accumulation path as well as the parallel normalize pass.
    out = conv2d_relu_bn(x, weight, bias, gamma, beta,
                         kernel_size=K, padding=PAD, dilation=DIL,
                         stride=STRIDE, block_rows=128)
    out = jax.block_until_ready(out)

    ref = _reference(x, weight, bias, gamma, beta,
                     padding=PAD, dilation=DIL, stride=STRIDE)
    assert out.shape == (N, C_OUT, H, W), out.shape
    assert jnp.allclose(out, ref, atol=1e-4, rtol=1e-4), float(jnp.max(jnp.abs(out - ref)))

    print("KERNEL_OK")
</pallas_src>

<mosaic_0001>
module attributes {stable_mosaic.version = 11 : i64} {
  func.func @_bn_apply_kernel(%arg0: i32, %arg1: memref<128x128xf32, #tpu.memory_space<vmem>>, %arg2: memref<1x128xf32, #tpu.memory_space<vmem>>, %arg3: memref<1x128xf32, #tpu.memory_space<vmem>>, %arg4: memref<1x128xf32, #tpu.memory_space<vmem>>, %arg5: memref<1x128xf32, #tpu.memory_space<vmem>>, %arg6: memref<128x128xf32, #tpu.memory_space<vmem>>) attributes {dimension_semantics = [#tpu.dimension_semantics<parallel>], iteration_bounds = array<i64: 4>, scalar_prefetch = 0 : i64, scratch_operands = 0 : i64, tpu.core_type = #tpu.core_type<tc>, window_params = [{transform_indices = @transform_0, window_bounds = array<i64: 128, 128>}, {pipeline_mode = #tpu.pipeline_mode<synchronous>, transform_indices = @transform_1, window_bounds = array<i64: 1, 128>}, {pipeline_mode = #tpu.pipeline_mode<synchronous>, transform_indices = @transform_2, window_bounds = array<i64: 1, 128>}, {pipeline_mode = #tpu.pipeline_mode<synchronous>, transform_indices = @transform_3, window_bounds = array<i64: 1, 128>}, {pipeline_mode = #tpu.pipeline_mode<synchronous>, transform_indices = @transform_4, window_bounds = array<i64: 1, 128>}, {transform_indices = @transform_5, window_bounds = array<i64: 128, 128>}]} {
    %c0 = arith.constant 0 : index
    %c0_0 = arith.constant 0 : index
    %0 = vector.load %arg2[%c0, %c0_0] : memref<1x128xf32, #tpu.memory_space<vmem>>, vector<1x128xf32>
    %cst = arith.constant 0.001953125 : f32
    %1 = vector.broadcast %cst : f32 to vector<1x128xf32>
    %2 = arith.mulf %0, %1 : vector<1x128xf32>
    %c0_1 = arith.constant 0 : index
    %c0_2 = arith.constant 0 : index
    %3 = vector.load %arg3[%c0_1, %c0_2] : memref<1x128xf32, #tpu.memory_space<vmem>>, vector<1x128xf32>
    %cst_3 = arith.constant 0.001953125 : f32
    %4 = vector.broadcast %cst_3 : f32 to vector<1x128xf32>
    %5 = arith.mulf %3, %4 : vector<1x128xf32>
    %6 = arith.mulf %2, %2 : vector<1x128xf32>
    %7 = arith.subf %5, %6 : vector<1x128xf32>
    %cst_4 = arith.constant 0.000000e+00 : f32
    %8 = vector.broadcast %cst_4 : f32 to vector<1x128xf32>
    %9 = arith.maximumf %7, %8 : vector<1x128xf32>
    %c0_5 = arith.constant 0 : index
    %c0_6 = arith.constant 0 : index
    %10 = vector.load %arg4[%c0_5, %c0_6] : memref<1x128xf32, #tpu.memory_space<vmem>>, vector<1x128xf32>
    %cst_7 = arith.constant 9.99999974E-6 : f32
    %11 = vector.broadcast %cst_7 : f32 to vector<1x128xf32>
    %12 = arith.addf %9, %11 : vector<1x128xf32>
    %13 = math.rsqrt %12 : vector<1x128xf32>
    %14 = arith.mulf %10, %13 : vector<1x128xf32>
    %c0_8 = arith.constant 0 : index
    %c0_9 = arith.constant 0 : index
    %15 = vector.load %arg5[%c0_8, %c0_9] : memref<1x128xf32, #tpu.memory_space<vmem>>, vector<1x128xf32>
    %16 = arith.mulf %2, %14 : vector<1x128xf32>
    %17 = arith.subf %15, %16 : vector<1x128xf32>
    %c0_10 = arith.constant 0 : index
    %c0_11 = arith.constant 0 : index
    %18 = vector.load %arg1[%c0_10, %c0_11] : memref<128x128xf32, #tpu.memory_space<vmem>>, vector<128x128xf32>
    %19 = vector.broadcast %14 : vector<1x128xf32> to vector<128x128xf32>
    %20 = arith.mulf %18, %19 : vector<128x128xf32>
    %21 = vector.broadcast %17 : vector<1x128xf32> to vector<128x128xf32>
    %22 = arith.addf %20, %21 : vector<128x128xf32>
    %c0_12 = arith.constant 0 : index
    %c0_13 = arith.constant 0 : index
    %23 = vector.load %arg6[%c0_12, %c0_13] : memref<128x128xf32, #tpu.memory_space<vmem>>, vector<128x128xf32>
    tpu.vector_store %arg6[%c0_12, %c0_13], %22 {strides = array<i32>} : memref<128x128xf32, #tpu.memory_space<vmem>>, vector<128x128xf32>,
    return
  }
  func.func @transform_0(%arg0: i32) -> (i32, i32) {
    %c0_i32 = arith.constant 0 : i32
    %c0_i32_0 = arith.constant 0 : i32
    return %arg0, %c0_i32 : i32, i32
  }
  func.func @transform_1(%arg0: i32) -> (i32, i32) {
    %c0_i32 = arith.constant 0 : i32
    %c0_i32_0 = arith.constant 0 : i32
    %c0_i32_1 = arith.constant 0 : i32
    return %c0_i32, %c0_i32_0 : i32, i32
  }
  func.func @transform_2(%arg0: i32) -> (i32, i32) {
    %c0_i32 = arith.constant 0 : i32
    %c0_i32_0 = arith.constant 0 : i32
    %c0_i32_1 = arith.constant 0 : i32
    return %c0_i32, %c0_i32_0 : i32, i32
  }
  func.func @transform_3(%arg0: i32) -> (i32, i32) {
    %c0_i32 = arith.constant 0 : i32
    %c0_i32_0 = arith.constant 0 : i32
    %c0_i32_1 = arith.constant 0 : i32
    return %c0_i32, %c0_i32_0 : i32, i32
  }
  func.func @transform_4(%arg0: i32) -> (i32, i32) {
    %c0_i32 = arith.constant 0 : i32
    %c0_i32_0 = arith.constant 0 : i32
    %c0_i32_1 = arith.constant 0 : i32
    return %c0_i32, %c0_i32_0 : i32, i32
  }
  func.func @transform_5(%arg0: i32) -> (i32, i32) {
    %c0_i32 = arith.constant 0 : i32
    %c0_i32_0 = arith.constant 0 : i32
    return %arg0, %c0_i32 : i32, i32
  }
}

module attributes {stable_mosaic.version = 11 : i64} {
  func.func @_gemm_relu_stats_kernel(%arg0: i32, %arg1: memref<128x36xf32, #tpu.memory_space<vmem>>, %arg2: memref<36x128xf32, #tpu.memory_space<vmem>>, %arg3: memref<1x128xf32, #tpu.memory_space<vmem>>, %arg4: memref<128x128xf32, #tpu.memory_space<vmem>>, %arg5: memref<1x128xf32, #tpu.memory_space<vmem>>, %arg6: memref<1x128xf32, #tpu.memory_space<vmem>>) attributes {dimension_semantics = [#tpu.dimension_semantics<arbitrary>], iteration_bounds = array<i64: 4>, scalar_prefetch = 0 : i64, scratch_operands = 0 : i64, tpu.core_type = #tpu.core_type<tc>, window_params = [{transform_indices = @transform_0, window_bounds = array<i64: 128, 36>}, {pipeline_mode = #tpu.pipeline_mode<synchronous>, transform_indices = @transform_1, window_bounds = array<i64: 36, 128>}, {pipeline_mode = #tpu.pipeline_mode<synchronous>, transform_indices = @transform_2, window_bounds = array<i64: 1, 128>}, {transform_indices = @transform_3, window_bounds = array<i64: 128, 128>}, {pipeline_mode = #tpu.pipeline_mode<synchronous>, transform_indices = @transform_4, window_bounds = array<i64: 1, 128>}, {pipeline_mode = #tpu.pipeline_mode<synchronous>, transform_indices = @transform_5, window_bounds = array<i64: 1, 128>}]} {
    %c0_i32 = arith.constant 0 : i32
    %0 = arith.cmpi eq, %arg0, %c0_i32 : i32
    %1 = arith.extui %0 : i1 to i32
    %c0_i32_0 = arith.constant 0 : i32
    %2 = arith.cmpi ne, %1, %c0_i32_0 : i32
    scf.if %2 {
      %cst_20 = arith.constant 0.000000e+00 : f32
      %33 = vector.broadcast %cst_20 : f32 to vector<1x128xf32>
      %c0_21 = arith.constant 0 : index
      %c0_22 = arith.constant 0 : index
      %34 = vector.load %arg5[%c0_21, %c0_22] : memref<1x128xf32, #tpu.memory_space<vmem>>, vector<1x128xf32>
      tpu.vector_store %arg5[%c0_21, %c0_22], %33 {strides = array<i32>} : memref<1x128xf32, #tpu.memory_space<vmem>>, vector<1x128xf32>,
      %cst_23 = arith.constant 0.000000e+00 : f32
      %35 = vector.broadcast %cst_23 : f32 to vector<1x128xf32>
      %c0_24 = arith.constant 0 : index
      %c0_25 = arith.constant 0 : index
      %36 = vector.load %arg6[%c0_24, %c0_25] : memref<1x128xf32, #tpu.memory_space<vmem>>, vector<1x128xf32>
      tpu.vector_store %arg6[%c0_24, %c0_25], %35 {strides = array<i32>} : memref<1x128xf32, #tpu.memory_space<vmem>>, vector<1x128xf32>,
    } else {
    }
    %c0 = arith.constant 0 : index
    %c0_1 = arith.constant 0 : index
    %3 = vector.load %arg1[%c0, %c0_1] : memref<128x36xf32, #tpu.memory_space<vmem>>, vector<128x36xf32>
    %c0_2 = arith.constant 0 : index
    %c0_3 = arith.constant 0 : index
    %4 = vector.load %arg2[%c0_2, %c0_3] : memref<36x128xf32, #tpu.memory_space<vmem>>, vector<36x128xf32>
    %cst = arith.constant dense<0.000000e+00> : vector<128x128xf32>
    %5 = tpu.matmul %3, %4, %cst {dimension_numbers = #tpu.dot_dimension_numbers<[1], [0], [0], [1], [0, 0, 1, 1], [], []>} : vector<128x36xf32>, vector<36x128xf32>, vector<128x128xf32> -> vector<128x128xf32>
    %c0_4 = arith.constant 0 : index
    %c0_5 = arith.constant 0 : index
    %6 = vector.load %arg3[%c0_4, %c0_5] : memref<1x128xf32, #tpu.memory_space<vmem>>, vector<1x128xf32>
    %7 = vector.broadcast %6 : vector<1x128xf32> to vector<128x128xf32>
    %8 = arith.addf %5, %7 : vector<128x128xf32>
    %cst_6 = arith.constant 0.000000e+00 : f32
    %9 = vector.broadcast %cst_6 : f32 to vector<128x128xf32>
    %10 = arith.maximumf %8, %9 : vector<128x128xf32>
    %c0_7 = arith.constant 0 : index
    %c0_8 = arith.constant 0 : index
    %11 = vector.load %arg4[%c0_7, %c0_8] : memref<128x128xf32, #tpu.memory_space<vmem>>, vector<128x128xf32>
    tpu.vector_store %arg4[%c0_7, %c0_8], %10 {strides = array<i32>} : memref<128x128xf32, #tpu.memory_space<vmem>>, vector<128x128xf32>,
    %c128_i32 = arith.constant 128 : i32
    %12 = arith.muli %arg0, %c128_i32 : i32
    %13 = tpu.iota {dimensions = array<i32: 0>} : vector<128x1xi32>
    %14 = vector.broadcast %12 : i32 to vector<128x1xi32>
    %15 = arith.addi %14, %13 : vector<128x1xi32>
    %c512_i32 = arith.constant 512 : i32
    %16 = vector.broadcast %c512_i32 : i32 to vector<128x1xi32>
    %17 = arith.cmpi slt, %15, %16 : vector<128x1xi32>
    %cst_9 = arith.constant 0.000000e+00 : f32
    %18 = vector.shape_cast %17 : vector<128x1xi1> to vector<128x1xi1>
    %19 = vector.broadcast %18 : vector<128x1xi1> to vector<128x128xi1>
    %20 = vector.broadcast %cst_9 : f32 to vector<128x128xf32>
    %21 = arith.select %19, %10, %20 : vector<128x128xi1>, vector<128x128xf32>
    %c0_10 = arith.constant 0 : index
    %c0_11 = arith.constant 0 : index
    %22 = vector.load %arg5[%c0_10, %c0_11] : memref<1x128xf32, #tpu.memory_space<vmem>>, vector<1x128xf32>
    %cst_12 = arith.constant dense<0.000000e+00> : vector<128xf32>
    %23 = vector.multi_reduction <add>, %21, %cst_12 [0] : vector<128x128xf32> to vector<128xf32>
    %24 = vector.shape_cast %23 : vector<128xf32> to vector<1x128xf32>
    %25 = arith.addf %22, %24 : vector<1x128xf32>
    %c0_13 = arith.constant 0 : index
    %c0_14 = arith.constant 0 : index
    %26 = vector.load %arg5[%c0_13, %c0_14] : memref<1x128xf32, #tpu.memory_space<vmem>>, vector<1x128xf32>
    tpu.vector_store %arg5[%c0_13, %c0_14], %25 {strides = array<i32>} : memref<1x128xf32, #tpu.memory_space<vmem>>, vector<1x128xf32>,
    %c0_15 = arith.constant 0 : index
    %c0_16 = arith.constant 0 : index
    %27 = vector.load %arg6[%c0_15, %c0_16] : memref<1x128xf32, #tpu.memory_space<vmem>>, vector<1x128xf32>
    %28 = arith.mulf %21, %21 : vector<128x128xf32>
    %cst_17 = arith.constant dense<0.000000e+00> : vector<128xf32>
    %29 = vector.multi_reduction <add>, %28, %cst_17 [0] : vector<128x128xf32> to vector<128xf32>
    %30 = vector.shape_cast %29 : vector<128xf32> to vector<1x128xf32>
    %31 = arith.addf %27, %30 : vector<1x128xf32>
    %c0_18 = arith.constant 0 : index
    %c0_19 = arith.constant 0 : index
    %32 = vector.load %arg6[%c0_18, %c0_19] : memref<1x128xf32, #tpu.memory_space<vmem>>, vector<1x128xf32>
    tpu.vector_store %arg6[%c0_18, %c0_19], %31 {strides = array<i32>} : memref<1x128xf32, #tpu.memory_space<vmem>>, vector<1x128xf32>,
    return
  }
  func.func @transform_0(%arg0: i32) -> (i32, i32) {
    %c0_i32 = arith.constant 0 : i32
    %c0_i32_0 = arith.constant 0 : i32
    return %arg0, %c0_i32 : i32, i32
  }
  func.func @transform_1(%arg0: i32) -> (i32, i32) {
    %c0_i32 = arith.constant 0 : i32
    %c0_i32_0 = arith.constant 0 : i32
    %c0_i32_1 = arith.constant 0 : i32
    return %c0_i32, %c0_i32_0 : i32, i32
  }
  func.func @transform_2(%arg0: i32) -> (i32, i32) {
    %c0_i32 = arith.constant 0 : i32
    %c0_i32_0 = arith.constant 0 : i32
    %c0_i32_1 = arith.constant 0 : i32
    return %c0_i32, %c0_i32_0 : i32, i32
  }
  func.func @transform_3(%arg0: i32) -> (i32, i32) {
    %c0_i32 = arith.constant 0 : i32
    %c0_i32_0 = arith.constant 0 : i32
    return %arg0, %c0_i32 : i32, i32
  }
  func.func @transform_4(%arg0: i32) -> (i32, i32) {
    %c0_i32 = arith.constant 0 : i32
    %c0_i32_0 = arith.constant 0 : i32
    %c0_i32_1 = arith.constant 0 : i32
    return %c0_i32, %c0_i32_0 : i32, i32
  }
  func.func @transform_5(%arg0: i32) -> (i32, i32) {
    %c0_i32 = arith.constant 0 : i32
    %c0_i32_0 = arith.constant 0 : i32
    %c0_i32_1 = arith.constant 0 : i32
    return %c0_i32, %c0_i32_0 : i32, i32
  }
}

</mosaic_0001>

<llo_original>
// kernel: conv2d_relu_bn.3
$region0: #{conv2d_relu_bn.3}
  #allocation0 [shape = 'u32[]', space=smem, size = 0x4, offset = 0x4, fixed_abs, tag = 'smem constant byte address 0x4 - core index']
  #allocation1 [shape = 'u32[144,128]{1,0:T(1,128)}', space=vmem, size = 0x12000, scoped, tag = 'internal scratch']
  %s0 = inlined_call_operand.vmem [shape: f32[512,128], index: 0, kind: input, shape index: {}]
  %s1 = inlined_call_operand.vmem [shape: f32[1,128], index: 1, kind: input, shape index: {}]
  %s2 = inlined_call_operand.vmem [shape: f32[1,128], index: 2, kind: input, shape index: {}]
  %s3 = inlined_call_operand.vmem [shape: f32[1,128], index: 3, kind: input, shape index: {}]
  %s4 = inlined_call_operand.vmem [shape: f32[1,128], index: 4, kind: input, shape index: {}]
  %s5 = inlined_call_operand.vmem [shape: f32[512,128], index: 5, kind: output, shape index: {}]
  %s6 = sld [smem:[#allocation0]]
  $region53: #{conv2d_relu_bn.3} parent=0
    _
  %s8 = ssub.s32 1, %s6
  %s9 = scalar_select 0, %s8, %s6
  loop: start=0, step=1, limit=6
  $region2: #{conv2d_relu_bn.3} parent=0 // loop_pre_header
    _
  $region3: #{conv2d_relu_bn.3} parent=0 // loop_header
    %s11 = sphi 0, %s15
    %p12 = scmp.ge.s32.totalorder %s11, 6
    %s21 = sphi 0, %s23
    %s24 = sphi 0, %s21
    %s25 = sphi 0, %s24
    %s41 = sphi 0, %s25
    %s45 = sphi 0, %s45
    %s47 = sphi 0, %s45
    %s48 = sphi 0, %s47
    %s62 = sphi 0, %s48
    %s66 = sphi 0, %s66
    %s68 = sphi 0, %s66
    %s69 = sphi 0, %s68
    %s83 = sphi 0, %s69
    %s87 = sphi 0, %s87
    %s89 = sphi 0, %s87
    %s90 = sphi 0, %s89
    %s104 = sphi 0, %s90
    %s108 = sphi 0, %s108
    %s110 = sphi 0, %s108
    %s111 = sphi 0, %s110
    %s125 = sphi 0, %s111
    %s131 = sphi 0, %s133
    %s134 = sphi 0, %s131
    %s135 = sphi 0, %s134
    %s151 = sphi 0, %s135
  $region4: #{conv2d_relu_bn.3} parent=0 // loop_header_branch
    %14 = sbr.rel (%p12) target = $region8
  $region5: #{conv2d_relu_bn.3} parent=0 // loop_body
    %s16 = ssub.s32 %s11, 1
    %s17 = ssub.s32 %s11, 2
    %s18 = sadd.s32 %s11, 1
    %s19 = ssub.s32 %s11, %s18
    %p20 = scmp.eq.s32.totalorder %s19, 0
    %s22 = sadd.s32 %s21, 1
    %s23 = scalar_select %p20, %s21, %s22
    %p26 = pneg %p20
    %p27 = scmp.eq.s32.totalorder %s11, 3
    %p28 = por %p26, %p27
    %p29 = scmp.ne.s32.totalorder %s21, %s24
    %p30 = scmp.eq.s32.totalorder %s11, 0
    %p31 = por %p29, %p30
    %p32 = scmp.ne.s32.totalorder %s21, %s24
    %p33 = scmp.eq.s32.totalorder %s16, 3
    %p34 = por %p32, %p33
    %p35 = scmp.ne.s32.totalorder %s24, %s25
    %p36 = scmp.eq.s32.totalorder %s16, 0
    %p37 = por %p35, %p36
    %p38 = scmp.ne.s32.totalorder %s24, %s25
    %p39 = scmp.eq.s32.totalorder %s17, 3
    %p40 = por %p38, %p39
    %p42 = scmp.ne.s32.totalorder %s25, %s41
    %p43 = scmp.eq.s32.totalorder %s17, 0
    %p44 = por %p42, %p43
    %s46 = sadd.s32 %s45, 1
    %p49 = scmp.eq.s32.totalorder %s11, 3
    %p50 = scmp.ne.s32.totalorder %s45, %s47
    %p51 = scmp.eq.s32.totalorder %s11, 0
    %p52 = por %p50, %p51
    %p53 = scmp.ne.s32.totalorder %s45, %s47
    %p54 = scmp.eq.s32.totalorder %s16, 3
    %p55 = por %p53, %p54
    %p56 = scmp.ne.s32.totalorder %s47, %s48
    %p57 = scmp.eq.s32.totalorder %s16, 0
    %p58 = por %p56, %p57
    %p59 = scmp.ne.s32.totalorder %s47, %s48
    %p60 = scmp.eq.s32.totalorder %s17, 3
    %p61 = por %p59, %p60
    %p63 = scmp.ne.s32.totalorder %s48, %s62
    %p64 = scmp.eq.s32.totalorder %s17, 0
    %p65 = por %p63, %p64
    %s67 = sadd.s32 %s66, 1
    %p70 = scmp.eq.s32.totalorder %s11, 3
    %p71 = scmp.ne.s32.totalorder %s66, %s68
    %p72 = scmp.eq.s32.totalorder %s11, 0
    %p73 = por %p71, %p72
    %p74 = scmp.ne.s32.totalorder %s66, %s68
    %p75 = scmp.eq.s32.totalorder %s16, 3
    %p76 = por %p74, %p75
    %p77 = scmp.ne.s32.totalorder %s68, %s69
    %p78 = scmp.eq.s32.totalorder %s16, 0
    %p79 = por %p77, %p78
    %p80 = scmp.ne.s32.totalorder %s68, %s69
    %p81 = scmp.eq.s32.totalorder %s17, 3
    %p82 = por %p80, %p81
    %p84 = scmp.ne.s32.totalorder %s69, %s83
    %p85 = scmp.eq.s32.totalorder %s17, 0
    %p86 = por %p84, %p85
    %s88 = sadd.s32 %s87, 1
    %p91 = scmp.eq.s32.totalorder %s11, 3
    %p92 = scmp.ne.s32.totalorder %s87, %s89
    %p93 = scmp.eq.s32.totalorder %s11, 0
    %p94 = por %p92, %p93
    %p95 = scmp.ne.s32.totalorder %s87, %s89
    %p96 = scmp.eq.s32.totalorder %s16, 3
    %p97 = por %p95, %p96
    %p98 = scmp.ne.s32.totalorder %s89, %s90
    %p99 = scmp.eq.s32.totalorder %s16, 0
    %p100 = por %p98, %p99
    %p101 = scmp.ne.s32.totalorder %s89, %s90
    %p102 = scmp.eq.s32.totalorder %s17, 3
    %p103 = por %p101, %p102
    %p105 = scmp.ne.s32.totalorder %s90, %s104
    %p106 = scmp.eq.s32.totalorder %s17, 0
    %p107 = por %p105, %p106
    %s109 = sadd.s32 %s108, 1
    %p112 = scmp.eq.s32.totalorder %s11, 3
    %p113 = scmp.ne.s32.totalorder %s108, %s110
    %p114 = scmp.eq.s32.totalorder %s11, 0
    %p115 = por %p113, %p114
    %p116 = scmp.ne.s32.totalorder %s108, %s110
    %p117 = scmp.eq.s32.totalorder %s16, 3
    %p118 = por %p116, %p117
    %p119 = scmp.ne.s32.totalorder %s110, %s111
    %p120 = scmp.eq.s32.totalorder %s16, 0
    %p121 = por %p119, %p120
    %p122 = scmp.ne.s32.totalorder %s110, %s111
    %p123 = scmp.eq.s32.totalorder %s17, 3
    %p124 = por %p122, %p123
    %p126 = scmp.ne.s32.totalorder %s111, %s125
    %p127 = scmp.eq.s32.totalorder %s17, 0
    %p128 = por %p126, %p127
    %s129 = ssub.s32 %s11, %s18
    %p130 = scmp.eq.s32.totalorder %s129, 0
    %s132 = sadd.s32 %s131, 1
    %s133 = scalar_select %p130, %s131, %s132
    %p136 = pneg %p130
    %p137 = scmp.eq.s32.totalorder %s11, 3
    %p138 = por %p136, %p137
    %p139 = scmp.ne.s32.totalorder %s131, %s134
    %p140 = scmp.eq.s32.totalorder %s11, 0
    %p141 = por %p139, %p140
    %p142 = scmp.ne.s32.totalorder %s131, %s134
    %p143 = scmp.eq.s32.totalorder %s16, 3
    %p144 = por %p142, %p143
    %p145 = scmp.ne.s32.totalorder %s134, %s135
    %p146 = scmp.eq.s32.totalorder %s16, 0
    %p147 = por %p145, %p146
    %p148 = scmp.ne.s32.totalorder %s134, %s135
    %p149 = scmp.eq.s32.totalorder %s17, 3
    %p150 = por %p148, %p149
    %p152 = scmp.ne.s32.totalorder %s135, %s151
    %p153 = scmp.eq.s32.totalorder %s17, 0
    %p154 = por %p152, %p153
    %p155 = scmp.le.s32.totalorder 1, %s11
    %p156 = scmp.lt.s32.totalorder %s11, 5
    %p157 = pnand %p155, %p156
    %p158 = pneg %p157
    // Predicated region
    $region9: #{conv2d_relu_bn.3} parent=5 // pred_check
      _
    $region10: #{conv2d_relu_bn.3} parent=5 // pred_check_branch
      %160 = sbr.rel (%p157) target = $region12
    $region11: #{conv2d_relu_bn.3} parent=5 // pred_region
      %s161 = ssub.s32 %s11, 1
      // Predicated region
      $region13: #{conv2d_relu_bn.3} parent=11 // pred_check
        %p162 = pneg %p58
      $region14: #{conv2d_relu_bn.3} parent=11 // pred_check_branch
        %164 = sbr.rel (%p162) target = $region16
      $region15: #{conv2d_relu_bn.3} parent=11 // pred_region
        _
      $region16: #{conv2d_relu_bn.3} parent=11 // pred_fallthru
        _
      // Predicated region
      $region17: #{conv2d_relu_bn.3} parent=11 // pred_check
        %p165 = pneg %p79
      $region18: #{conv2d_relu_bn.3} parent=11 // pred_check_branch
        %167 = sbr.rel (%p165) target = $region20
      $region19: #{conv2d_relu_bn.3} parent=11 // pred_region
        _
      $region20: #{conv2d_relu_bn.3} parent=11 // pred_fallthru
        _
      // Predicated region
      $region21: #{conv2d_relu_bn.3} parent=11 // pred_check
        %p168 = pneg %p100
      $region22: #{conv2d_relu_bn.3} parent=11 // pred_check_branch
        %170 = sbr.rel (%p168) target = $region24
      $region23: #{conv2d_relu_bn.3} parent=11 // pred_region
        _
      $region24: #{conv2d_relu_bn.3} parent=11 // pred_fallthru
        _
      // Predicated region
      $region25: #{conv2d_relu_bn.3} parent=11 // pred_check
        %p171 = pneg %p121
      $region26: #{conv2d_relu_bn.3} parent=11 // pred_check_branch
        %173 = sbr.rel (%p171) target = $region28
      $region27: #{conv2d_relu_bn.3} parent=11 // pred_region
        _
      $region28: #{conv2d_relu_bn.3} parent=11 // pred_fallthru
        _
    $region12: #{conv2d_relu_bn.3} parent=5 // pred_fallthru
      _
    %p174 = scmp.lt.s32.totalorder %s11, 4
    // Predicated region
    $region29: #{conv2d_relu_bn.3} parent=5 // pred_check
      %p175 = pneg %p174
    $region30: #{conv2d_relu_bn.3} parent=5 // pred_check_branch
      %177 = sbr.rel (%p175) target = $region32
    $region31: #{conv2d_relu_bn.3} parent=5 // pred_region
      // Predicated region
      $region33: #{conv2d_relu_bn.3} parent=31 // pred_check
        %p178 = pneg %p31
      $region34: #{conv2d_relu_bn.3} parent=31 // pred_check_branch
        %180 = sbr.rel (%p178) target = $region36
      $region35: #{conv2d_relu_bn.3} parent=31 // pred_region
        %s181 = smul.u32 16, %s11
        %p182 = scmp.lt.s32.totalorder %s181, 63
        %s183 = scalar_select %p182, %s181, 63
        %s184 = smul.addr %s183, 8
        %s185 = scalar_lea.vmem %s0, %s184
        %s186 = smul.u32 16, %s11
      $region36: #{conv2d_relu_bn.3} parent=31 // pred_fallthru
        _
    $region32: #{conv2d_relu_bn.3} parent=5 // pred_fallthru
      _
    %p187 = scmp.le.s32.totalorder 1, %s11
    %p188 = scmp.lt.s32.totalorder %s11, 5
    %p189 = pnand %p187, %p188
    %p190 = pneg %p189
    // Predicated region
    $region37: #{conv2d_relu_bn.3} parent=5 // pred_check
      _
    $region38: #{conv2d_relu_bn.3} parent=5 // pred_check_branch
      %192 = sbr.rel (%p189) target = $region40
    $region39: #{conv2d_relu_bn.3} parent=5 // pred_region
      %s193 = ssub.s32 %s11, 1
      %s194 = smul.u32 16, %s16
      %p195 = scmp.lt.s32.totalorder %s194, 63
      %s196 = scalar_select %p195, %s194, 63
      %s197 = smul.addr %s196, 8
      %s198 = scalar_lea.vmem %s0, %s197
      %p199 = pneg %p37
      %p200 = pneg %p34
      %p201 = pneg %p58
      %p202 = pneg %p55
      %p203 = pneg %p79
      %p204 = pneg %p76
      %p205 = pneg %p100
      %p206 = pneg %p97
      %p207 = pneg %p121
      %p208 = pneg %p118
      %p209 = pneg %p147
      %p210 = pneg %p144
      %s211 = smul.u32 16, %s16
      %p212 = scmp.lt.s32.totalorder %s211, 63
      %s213 = scalar_select %p212, %s211, 63
      %s214 = smul.addr %s213, 8
      %s215 = scalar_lea.vmem %s5, %s214
      %s216 = smul.u32 16, %s16
      %p217 = scmp.lt.s32.totalorder %s216, 63
      %s218 = scalar_select %p217, %s216, 63
      %s219 = smul.addr %s218, 8
      %s220 = scalar_lea.vmem %s0, %s219
      %s221 = smul.u32 16, %s16
      %s222 = smul.u32 16, %s16
      %p223 = scmp.lt.s32.totalorder %s222, 63
      %s224 = scalar_select %p223, %s222, 63
      %s225 = smul.addr %s224, 8
      %s226 = scalar_lea.vmem %s5, %s225
      %s227 = smul.u32 16, %s16
      %v228 = vld [vmem:[%s1] sm:$0x1]
      %v229 = vmul.f32 %v228, 0.001953125
      %v230 = vld [vmem:[%s2] sm:$0x1]
      %v231 = vmul.f32 %v230, 0.001953125
      %v232 = vmul.f32 %v229, %v229
      %v233 = vsub.f32 %v231, %v232
      %v234 = vmax.f32 %v233, 0.0
      %v235 = vld [vmem:[%s3] sm:$0x1]
      %v236 = vadd.f32 %v234, 1e-05
      %v237 = vrsqrt.pop %v236
      %v238 = vmul.f32 %v235, %v237
      %v239 = vld [vmem:[%s4] sm:$0x1]
      %v240 = vmul.f32 %v229, %v238
      %v241 = vsub.f32 %v239, %v240
      %v242 = vld [vmem:[%s220] sm:$0xff]
      %v243 = vld [vmem:[%s220 + $0x8] sm:$0xff]
      %v244 = vld [vmem:[%s220 + $0x10] sm:$0xff]
      %v245 = vld [vmem:[%s220 + $0x18] sm:$0xff]
      %v246 = vld [vmem:[%s220 + $0x20] sm:$0xff]
      %v247 = vld [vmem:[%s220 + $0x28] sm:$0xff]
      %v248 = vld [vmem:[%s220 + $0x30] sm:$0xff]
      %v249 = vld [vmem:[%s220 + $0x38] sm:$0xff]
      %v250 = vld [vmem:[%s220 + $0x40] sm:$0xff]
      %v251 = vld [vmem:[%s220 + $0x48] sm:$0xff]
      %v252 = vld [vmem:[%s220 + $0x50] sm:$0xff]
      %v253 = vld [vmem:[%s220 + $0x58] sm:$0xff]
      %v254 = vld [vmem:[%s220 + $0x60] sm:$0xff]
      %v255 = vld [vmem:[%s220 + $0x68] sm:$0xff]
      %v256 = vld [vmem:[%s220 + $0x70] sm:$0xff]
      %v257 = vld [vmem:[%s220 + $0x78] sm:$0xff]
      %v259 = vlaneseq
      %v260 = vshrl.u32 %v259, 7
      %v261 = vsub.s32 0, %v260
      %v262 = vrot.slane %v238, %v261
      %v264 = vmul.f32 %v242, %v262
      %v265 = vmul.f32 %v243, %v262
      %v266 = vmul.f32 %v244, %v262
      %v267 = vmul.f32 %v245, %v262
      %v268 = vmul.f32 %v246, %v262
      %v269 = vmul.f32 %v247, %v262
      %v270 = vmul.f32 %v248, %v262
      %v271 = vmul.f32 %v249, %v262
      %v272 = vmul.f32 %v250, %v262
      %v273 = vmul.f32 %v251, %v262
      %v274 = vmul.f32 %v252, %v262
      %v275 = vmul.f32 %v253, %v262
      %v276 = vmul.f32 %v254, %v262
      %v277 = vmul.f32 %v255, %v262
      %v278 = vmul.f32 %v256, %v262
      %v279 = vmul.f32 %v257, %v262
      %v281 = vlaneseq
      %v282 = vshrl.u32 %v281, 7
      %v283 = vsub.s32 0, %v282
      %v284 = vrot.slane %v241, %v283
      %v286 = vadd.f32 %v264, %v284
      %v287 = vadd.f32 %v265, %v284
      %v288 = vadd.f32 %v266, %v284
      %v289 = vadd.f32 %v267, %v284
      %v290 = vadd.f32 %v268, %v284
      %v291 = vadd.f32 %v269, %v284
      %v292 = vadd.f32 %v270, %v284
      %v293 = vadd.f32 %v271, %v284
      %v294 = vadd.f32 %v272, %v284
      %v295 = vadd.f32 %v273, %v284
      %v296 = vadd.f32 %v274, %v284
      %v297 = vadd.f32 %v275, %v284
      %v298 = vadd.f32 %v276, %v284
      %v299 = vadd.f32 %v277, %v284
      %v300 = vadd.f32 %v278, %v284
      %v301 = vadd.f32 %v279, %v284
      %302 = vst [vmem:[%s226] sm:$0xff] %v286
      %303 = vst [vmem:[%s226 + $0x8] sm:$0xff] %v287
      %304 = vst [vmem:[%s226 + $0x10] sm:$0xff] %v288
      %305 = vst [vmem:[%s226 + $0x18] sm:$0xff] %v289
      %306 = vst [vmem:[%s226 + $0x20] sm:$0xff] %v290
      %307 = vst [vmem:[%s226 + $0x28] sm:$0xff] %v291
      %308 = vst [vmem:[%s226 + $0x30] sm:$0xff] %v292
      %309 = vst [vmem:[%s226 + $0x38] sm:$0xff] %v293
      %310 = vst [vmem:[%s226 + $0x40] sm:$0xff] %v294
      %311 = vst [vmem:[%s226 + $0x48] sm:$0xff] %v295
      %312 = vst [vmem:[%s226 + $0x50] sm:$0xff] %v296
      %313 = vst [vmem:[%s226 + $0x58] sm:$0xff] %v297
      %314 = vst [vmem:[%s226 + $0x60] sm:$0xff] %v298
      %315 = vst [vmem:[%s226 + $0x68] sm:$0xff] %v299
      %316 = vst [vmem:[%s226 + $0x70] sm:$0xff] %v300
      %317 = vst [vmem:[%s226 + $0x78] sm:$0xff] %v301
      %s318 = smul.u32 16, %s16
      %p319 = scmp.lt.s32.totalorder %s318, 63
      %s320 = scalar_select %p319, %s318, 63
      %s321 = smul.addr %s320, 8
      %s322 = scalar_lea.vmem %s5, %s321
      // Predicated region
      $region41: #{conv2d_relu_bn.3} parent=39 // pred_check
        %p323 = pneg %p144
      $region42: #{conv2d_relu_bn.3} parent=39 // pred_check_branch
        %325 = sbr.rel (%p323) target = $region44
      $region43: #{conv2d_relu_bn.3} parent=39 // pred_region
        %s326 = smul.u32 16, %s16
      $region44: #{conv2d_relu_bn.3} parent=39 // pred_fallthru
        _
    $region40: #{conv2d_relu_bn.3} parent=5 // pred_fallthru
      _
    %p327 = scmp.le.s32.totalorder 2, %s11
    // Predicated region
    $region45: #{conv2d_relu_bn.3} parent=5 // pred_check
      %p328 = pneg %p327
    $region46: #{conv2d_relu_bn.3} parent=5 // pred_check_branch
      %330 = sbr.rel (%p328) target = $region48
    $region47: #{conv2d_relu_bn.3} parent=5 // pred_region
      %s331 = ssub.s32 %s11, 2
      // Predicated region
      $region49: #{conv2d_relu_bn.3} parent=47 // pred_check
        %p332 = pneg %p150
      $region50: #{conv2d_relu_bn.3} parent=47 // pred_check_branch
        %334 = sbr.rel (%p332) target = $region52
      $region51: #{conv2d_relu_bn.3} parent=47 // pred_region
        %s335 = smul.u32 16, %s17
        %p336 = scmp.lt.s32.totalorder %s335, 63
        %s337 = scalar_select %p336, %s335, 63
        %s338 = smul.addr %s337, 8
        %s339 = scalar_lea.vmem %s5, %s338
      $region52: #{conv2d_relu_bn.3} parent=47 // pred_fallthru
        _
    $region48: #{conv2d_relu_bn.3} parent=5 // pred_fallthru
      _
  $region6: #{conv2d_relu_bn.3} parent=0 // loop_footer
    %s15 = sadd.s32 1, %s11
  $region7: #{conv2d_relu_bn.3} parent=0 // loop_footer_branch
    %10 = sbr.rel target = $region3
  $region8: #{conv2d_relu_bn.3} parent=0 // loop_exit
    _

// kernel: conv2d_relu_bn.2
$region0: #{conv2d_relu_bn.2}
  #allocation0 [shape = 'u32[]', space=smem, size = 0x4, offset = 0x4, fixed_abs, tag = 'smem constant byte address 0x4 - core index']
  #allocation1 [shape = 'u32[144,128]{1,0:T(1,128)}', space=vmem, size = 0x12000, scoped, tag = 'internal scratch']
  %s0 = inlined_call_operand.vmem [shape: f32[512,36], index: 0, kind: input, shape index: {}]
  %s1 = inlined_call_operand.vmem [shape: f32[36,128], index: 1, kind: input, shape index: {}]
  %s2 = inlined_call_operand.vmem [shape: f32[1,128], index: 2, kind: input, shape index: {}]
  %s3 = inlined_call_operand.vmem [shape: f32[512,128], index: 3, kind: output, shape index: {0}]
  %s4 = inlined_call_operand.vmem [shape: f32[1,128], index: 4, kind: output, shape index: {1}]
  %s5 = inlined_call_operand.vmem [shape: f32[1,128], index: 5, kind: output, shape index: {2}]
  %6 = xla_tuple %s3, %s4, %s5
  %s7 = sld [smem:[#allocation0]]
  $region65: #{conv2d_relu_bn.2} parent=0
    _
  %s9 = ssub.s32 1, %s7
  %s10 = scalar_select 0, %s9, %s7
  loop: start=0, step=1, limit=6
  $region2: #{conv2d_relu_bn.2} parent=0 // loop_pre_header
    _
  $region3: #{conv2d_relu_bn.2} parent=0 // loop_header
    %s12 = sphi 0, %s16
    %p13 = scmp.ge.s32.totalorder %s12, 6
    %s22 = sphi 0, %s24
    %s25 = sphi 0, %s22
    %s26 = sphi 0, %s25
    %s42 = sphi 0, %s26
    %s46 = sphi 0, %s46
    %s48 = sphi 0, %s46
    %s49 = sphi 0, %s48
    %s63 = sphi 0, %s49
    %s67 = sphi 0, %s67
    %s69 = sphi 0, %s67
    %s70 = sphi 0, %s69
    %s84 = sphi 0, %s70
    %s90 = sphi 0, %s92
    %s93 = sphi 0, %s90
    %s94 = sphi 0, %s93
    %s110 = sphi 0, %s94
    %s114 = sphi 0, %s114
    %s116 = sphi 0, %s114
    %s117 = sphi 0, %s116
    %s131 = sphi 0, %s117
    %s135 = sphi 0, %s135
    %s137 = sphi 0, %s135
    %s138 = sphi 0, %s137
    %s152 = sphi 0, %s138
  $region4: #{conv2d_relu_bn.2} parent=0 // loop_header_branch
    %15 = sbr.rel (%p13) target = $region8
  $region5: #{conv2d_relu_bn.2} parent=0 // loop_body
    %s17 = ssub.s32 %s12, 1
    %s18 = ssub.s32 %s12, 2
    %s19 = sadd.s32 %s12, 1
    %s20 = ssub.s32 %s12, %s19
    %p21 = scmp.eq.s32.totalorder %s20, 0
    %s23 = sadd.s32 %s22, 1
    %s24 = scalar_select %p21, %s22, %s23
    %p27 = pneg %p21
    %p28 = scmp.eq.s32.totalorder %s12, 3
    %p29 = por %p27, %p28
    %p30 = scmp.ne.s32.totalorder %s22, %s25
    %p31 = scmp.eq.s32.totalorder %s12, 0
    %p32 = por %p30, %p31
    %p33 = scmp.ne.s32.totalorder %s22, %s25
    %p34 = scmp.eq.s32.totalorder %s17, 3
    %p35 = por %p33, %p34
    %p36 = scmp.ne.s32.totalorder %s25, %s26
    %p37 = scmp.eq.s32.totalorder %s17, 0
    %p38 = por %p36, %p37
    %p39 = scmp.ne.s32.totalorder %s25, %s26
    %p40 = scmp.eq.s32.totalorder %s18, 3
    %p41 = por %p39, %p40
    %p43 = scmp.ne.s32.totalorder %s26, %s42
    %p44 = scmp.eq.s32.totalorder %s18, 0
    %p45 = por %p43, %p44
    %s47 = sadd.s32 %s46, 1
    %p50 = scmp.eq.s32.totalorder %s12, 3
    %p51 = scmp.ne.s32.totalorder %s46, %s48
    %p52 = scmp.eq.s32.totalorder %s12, 0
    %p53 = por %p51, %p52
    %p54 = scmp.ne.s32.totalorder %s46, %s48
    %p55 = scmp.eq.s32.totalorder %s17, 3
    %p56 = por %p54, %p55
    %p57 = scmp.ne.s32.totalorder %s48, %s49
    %p58 = scmp.eq.s32.totalorder %s17, 0
    %p59 = por %p57, %p58
    %p60 = scmp.ne.s32.totalorder %s48, %s49
    %p61 = scmp.eq.s32.totalorder %s18, 3
    %p62 = por %p60, %p61
    %p64 = scmp.ne.s32.totalorder %s49, %s63
    %p65 = scmp.eq.s32.totalorder %s18, 0
    %p66 = por %p64, %p65
    %s68 = sadd.s32 %s67, 1
    %p71 = scmp.eq.s32.totalorder %s12, 3
    %p72 = scmp.ne.s32.totalorder %s67, %s69
    %p73 = scmp.eq.s32.totalorder %s12, 0
    %p74 = por %p72, %p73
    %p75 = scmp.ne.s32.totalorder %s67, %s69
    %p76 = scmp.eq.s32.totalorder %s17, 3
    %p77 = por %p75, %p76
    %p78 = scmp.ne.s32.totalorder %s69, %s70
    %p79 = scmp.eq.s32.totalorder %s17, 0
    %p80 = por %p78, %p79
    %p81 = scmp.ne.s32.totalorder %s69, %s70
    %p82 = scmp.eq.s32.totalorder %s18, 3
    %p83 = por %p81, %p82
    %p85 = scmp.ne.s32.totalorder %s70, %s84
    %p86 = scmp.eq.s32.totalorder %s18, 0
    %p87 = por %p85, %p86
    %s88 = ssub.s32 %s12, %s19
    %p89 = scmp.eq.s32.totalorder %s88, 0
    %s91 = sadd.s32 %s90, 1
    %s92 = scalar_select %p89, %s90, %s91
    %p95 = pneg %p89
    %p96 = scmp.eq.s32.totalorder %s12, 3
    %p97 = por %p95, %p96
    %p98 = scmp.ne.s32.totalorder %s90, %s93
    %p99 = scmp.eq.s32.totalorder %s12, 0
    %p100 = por %p98, %p99
    %p101 = scmp.ne.s32.totalorder %s90, %s93
    %p102 = scmp.eq.s32.totalorder %s17, 3
    %p103 = por %p101, %p102
    %p104 = scmp.ne.s32.totalorder %s93, %s94
    %p105 = scmp.eq.s32.totalorder %s17, 0
    %p106 = por %p104, %p105
    %p107 = scmp.ne.s32.totalorder %s93, %s94
    %p108 = scmp.eq.s32.totalorder %s18, 3
    %p109 = por %p107, %p108
    %p111 = scmp.ne.s32.totalorder %s94, %s110
    %p112 = scmp.eq.s32.totalorder %s18, 0
    %p113 = por %p111, %p112
    %s115 = sadd.s32 %s114, 1
    %p118 = scmp.eq.s32.totalorder %s12, 3
    %p119 = scmp.ne.s32.totalorder %s114, %s116
    %p120 = scmp.eq.s32.totalorder %s12, 0
    %p121 = por %p119, %p120
    %p122 = scmp.ne.s32.totalorder %s114, %s116
    %p123 = scmp.eq.s32.totalorder %s17, 3
    %p124 = por %p122, %p123
    %p125 = scmp.ne.s32.totalorder %s116, %s117
    %p126 = scmp.eq.s32.totalorder %s17, 0
    %p127 = por %p125, %p126
    %p128 = scmp.ne.s32.totalorder %s116, %s117
    %p129 = scmp.eq.s32.totalorder %s18, 3
    %p130 = por %p128, %p129
    %p132 = scmp.ne.s32.totalorder %s117, %s131
    %p133 = scmp.eq.s32.totalorder %s18, 0
    %p134 = por %p132, %p133
    %s136 = sadd.s32 %s135, 1
    %p139 = scmp.eq.s32.totalorder %s12, 3
    %p140 = scmp.ne.s32.totalorder %s135, %s137
    %p141 = scmp.eq.s32.totalorder %s12, 0
    %p142 = por %p140, %p141
    %p143 = scmp.ne.s32.totalorder %s135, %s137
    %p144 = scmp.eq.s32.totalorder %s17, 3
    %p145 = por %p143, %p144
    %p146 = scmp.ne.s32.totalorder %s137, %s138
    %p147 = scmp.eq.s32.totalorder %s17, 0
    %p148 = por %p146, %p147
    %p149 = scmp.ne.s32.totalorder %s137, %s138
    %p150 = scmp.eq.s32.totalorder %s18, 3
    %p151 = por %p149, %p150
    %p153 = scmp.ne.s32.totalorder %s138, %s152
    %p154 = scmp.eq.s32.totalorder %s18, 0
    %p155 = por %p153, %p154
    %p156 = scmp.le.s32.totalorder 1, %s12
    %p157 = scmp.lt.s32.totalorder %s12, 5
    %p158 = pnand %p156, %p157
    %p159 = pneg %p158
    // Predicated region
    $region9: #{conv2d_relu_bn.2} parent=5 // pred_check
      _
    $region10: #{conv2d_relu_bn.2} parent=5 // pred_check_branch
      %161 = sbr.rel (%p158) target = $region12
    $region11: #{conv2d_relu_bn.2} parent=5 // pred_region
      %s162 = ssub.s32 %s12, 1
      // Predicated region
      $region13: #{conv2d_relu_bn.2} parent=11 // pred_check
        %p163 = pneg %p59
      $region14: #{conv2d_relu_bn.2} parent=11 // pred_check_branch
        %165 = sbr.rel (%p163) target = $region16
      $region15: #{conv2d_relu_bn.2} parent=11 // pred_region
        _
      $region16: #{conv2d_relu_bn.2} parent=11 // pred_fallthru
        _
      // Predicated region
      $region17: #{conv2d_relu_bn.2} parent=11 // pred_check
        %p166 = pneg %p80
      $region18: #{conv2d_relu_bn.2} parent=11 // pred_check_branch
        %168 = sbr.rel (%p166) target = $region20
      $region19: #{conv2d_relu_bn.2} parent=11 // pred_region
        _
      $region20: #{conv2d_relu_bn.2} parent=11 // pred_fallthru
        _
    $region12: #{conv2d_relu_bn.2} parent=5 // pred_fallthru
      _
    %p169 = scmp.lt.s32.totalorder %s12, 4
    // Predicated region
    $region21: #{conv2d_relu_bn.2} parent=5 // pred_check
      %p170 = pneg %p169
    $region22: #{conv2d_relu_bn.2} parent=5 // pred_check_branch
      %172 = sbr.rel (%p170) target = $region24
    $region23: #{conv2d_relu_bn.2} parent=5 // pred_region
      // Predicated region
      $region25: #{conv2d_relu_bn.2} parent=23 // pred_check
        %p173 = pneg %p32
      $region26: #{conv2d_relu_bn.2} parent=23 // pred_check_branch
        %175 = sbr.rel (%p173) target = $region28
      $region27: #{conv2d_relu_bn.2} parent=23 // pred_region
        %s176 = smul.u32 16, %s12
        %p177 = scmp.lt.s32.totalorder %s176, 63
        %s178 = scalar_select %p177, %s176, 63
        %s179 = smul.addr %s178, 8
        %s180 = scalar_lea.vmem %s0, %s179
        %s181 = smul.u32 16, %s12
      $region28: #{conv2d_relu_bn.2} parent=23 // pred_fallthru
        _
    $region24: #{conv2d_relu_bn.2} parent=5 // pred_fallthru
      _
    %p182 = scmp.le.s32.totalorder 1, %s12
    %p183 = scmp.lt.s32.totalorder %s12, 5
    %p184 = pnand %p182, %p183
    %p185 = pneg %p184
    // Predicated region
    $region29: #{conv2d_relu_bn.2} parent=5 // pred_check
      _
    $region30: #{conv2d_relu_bn.2} parent=5 // pred_check_branch
      %187 = sbr.rel (%p184) target = $region32
    $region31: #{conv2d_relu_bn.2} parent=5 // pred_region
      %s188 = ssub.s32 %s12, 1
      %s189 = smul.u32 16, %s17
      %p190 = scmp.lt.s32.totalorder %s189, 63
      %s191 = scalar_select %p190, %s189, 63
      %s192 = smul.addr %s191, 8
      %s193 = scalar_lea.vmem %s0, %s192
      %p194 = pneg %p38
      %p195 = pneg %p35
      %p196 = pneg %p59
      %p197 = pneg %p56
      %p198 = pneg %p80
      %p199 = pneg %p77
      %p200 = pneg %p106
      %p201 = pneg %p103
      %s202 = smul.u32 16, %s17
      %p203 = scmp.lt.s32.totalorder %s202, 63
      %s204 = scalar_select %p203, %s202, 63
      %s205 = smul.addr %s204, 8
      %s206 = scalar_lea.vmem %s3, %s205
      %p207 = pneg %p127
      %p208 = pneg %p124
      %p209 = pneg %p148
      %p210 = pneg %p145
      %s211 = smul.u32 16, %s17
      %p212 = scmp.lt.s32.totalorder %s211, 63
      %s213 = scalar_select %p212, %s211, 63
      %s214 = smul.addr %s213, 8
      %s215 = scalar_lea.vmem %s0, %s214
      %s216 = smul.u32 16, %s17
      %s217 = smul.u32 16, %s17
      %p218 = scmp.lt.s32.totalorder %s217, 63
      %s219 = scalar_select %p218, %s217, 63
      %s220 = smul.addr %s219, 8
      %s221 = scalar_lea.vmem %s3, %s220
      %s222 = smul.u32 16, %s17
      %p223 = scmp.eq.s32.totalorder %s17, 0
      // Predicated region
      $region33: #{conv2d_relu_bn.2} parent=31 // pred_check
        %p224 = pneg %p223
      $region34: #{conv2d_relu_bn.2} parent=31 // pred_check_branch
        %226 = sbr.rel (%p224) target = $region36
      $region35: #{conv2d_relu_bn.2} parent=31 // pred_region
        %227 = vst [vmem:[%s4] sm:$0x1] 0.0
        %228 = vst [vmem:[%s5] sm:$0x1] 0.0
      $region36: #{conv2d_relu_bn.2} parent=31 // pred_fallthru
        _
      %v229 = vld [vmem:[%s215] sm:$0xff]
      %v230 = vld [vmem:[%s215 + $0x8] sm:$0xff]
      %v231 = vld [vmem:[%s215 + $0x10] sm:$0xff]
      %v232 = vld [vmem:[%s215 + $0x18] sm:$0xff]
      %v233 = vld [vmem:[%s215 + $0x20] sm:$0xff]
      %v234 = vld [vmem:[%s215 + $0x28] sm:$0xff]
      %v235 = vld [vmem:[%s215 + $0x30] sm:$0xff]
      %v236 = vld [vmem:[%s215 + $0x38] sm:$0xff]
      %v237 = vld [vmem:[%s215 + $0x40] sm:$0xff]
      %v238 = vld [vmem:[%s215 + $0x48] sm:$0xff]
      %v239 = vld [vmem:[%s215 + $0x50] sm:$0xff]
      %v240 = vld [vmem:[%s215 + $0x58] sm:$0xff]
      %v241 = vld [vmem:[%s215 + $0x60] sm:$0xff]
      %v242 = vld [vmem:[%s215 + $0x68] sm:$0xff]
      %v243 = vld [vmem:[%s215 + $0x70] sm:$0xff]
      %v244 = vld [vmem:[%s215 + $0x78] sm:$0xff]
      %v245 = vld [vmem:[%s1] sm:$0xff]
      %v246 = vld [vmem:[%s1 + $0x8] sm:$0xff]
      %v247 = vld [vmem:[%s1 + $0x10] sm:$0xff]
      %v248 = vld [vmem:[%s1 + $0x18] sm:$0xff]
      %v249 = vld [vmem:[%s1 + $0x20] sm:$0xf]
      %v250 = vld [vmem:[%s2] sm:$0x1]
      %v252 = vlaneseq
      %v253 = vshrl.u32 %v252, 7
      %v254 = vsub.s32 0, %v253
      %v255 = vrot.slane %v250, %v254
      %vm257 = vcmask 293888
      %v259 = vsel %vm257, %v229, 0
      %v262 = vsel %vm257, %v230, 0
      %v265 = vsel %vm257, %v231, 0
      %v268 = vsel %vm257, %v232, 0
      %v271 = vsel %vm257, %v233, 0
      %v274 = vsel %vm257, %v234, 0
      %v277 = vsel %vm257, %v235, 0
      %v280 = vsel %vm257, %v236, 0
      %v283 = vsel %vm257, %v237, 0
      %v286 = vsel %vm257, %v238, 0
      %v289 = vsel %vm257, %v239, 0
      %v292 = vsel %vm257, %v240, 0
      %v295 = vsel %vm257, %v241, 0
      %v298 = vsel %vm257, %v242, 0
      %v301 = vsel %vm257, %v243, 0
      %v304 = vsel %vm257, %v244, 0
      %vm306 = vcmask 1043456
      %v308 = vsel %vm306, %v249, 0
      %310 = vmatprep.subr.mxu0 0.0
      %311 = vmatpush1.msra.mxu0 0.0
      %312 = vmatprep.subr.mxu0 0.0
      %313 = vmatpush1.msra.mxu0 0.0
      %314 = vmatprep.subr.mxu0 0.0
      %315 = vmatpush1.msra.mxu0 0.0
      %316 = vmatprep.subr.mxu0 0.0
      %317 = vmatpush1.msra.mxu0 0.0
      %318 = vmatprep.subr.mxu0 0.0
      %319 = vmatpush1.msra.mxu0 0.0
      %320 = vmatprep.subr.mxu0 0.0
      %321 = vmatpush1.msra.mxu0 0.0
      %322 = vmatprep.subr.mxu0 0.0
      %323 = vmatpush1.msra.mxu0 0.0
      %324 = vmatprep.subr.mxu0 0.0
      %325 = vmatpush1.msra.mxu0 0.0
      %326 = vmatprep.subr.mxu0 0.0
      %327 = vmatpush1.msra.mxu0 0.0
      %328 = vmatprep.subr.mxu0 0.0
      %329 = vmatpush1.msra.mxu0 0.0
      %330 = vmatprep.subr.mxu0 0.0
      %331 = vmatpush1.msra.mxu0 0.0
      %332 = vmatprep.subr.mxu0 0.0
      %333 = vmatpush1.msra.mxu0 %v308
      %334 = vmatprep.subr.mxu0 0.0
      %335 = vmatpush1.msra.mxu0 %v248
      %336 = vmatprep.subr.mxu0 0.0
      %337 = vmatpush1.msra.mxu0 %v247
      %338 = vmatprep.subr.mxu0 0.0
      %339 = vmatpush1.msra.mxu0 %v246
      %340 = vmatprep.subr.mxu0 0.0
      %341 = vmatpush1.msra.mxu0 %v245
      %342 = vmatprep.subr.mxu0 0.0
      %343 = vmatpush2.msra.mxu0 0.0
      %344 = vmatprep.subr.mxu0 0.0
      %345 = vmatpush2.msra.mxu0 0.0
      %346 = vmatprep.subr.mxu0 0.0
      %347 = vmatpush2.msra.mxu0 0.0
      %348 = vmatprep.subr.mxu0 0.0
      %349 = vmatpush2.msra.mxu0 0.0
      %350 = vmatprep.subr.mxu0 0.0
      %351 = vmatpush2.msra.mxu0 0.0
      %352 = vmatprep.subr.mxu0 0.0
      %353 = vmatpush2.msra.mxu0 0.0
      %354 = vmatprep.subr.mxu0 0.0
      %355 = vmatpush2.msra.mxu0 0.0
      %356 = vmatprep.subr.mxu0 0.0
      %357 = vmatpush2.msra.mxu0 0.0
      %358 = vmatprep.subr.mxu0 0.0
      %359 = vmatpush2.msra.mxu0 0.0
      %360 = vmatprep.subr.mxu0 0.0
      %361 = vmatpush2.msra.mxu0 0.0
      %362 = vmatprep.subr.mxu0 0.0
      %363 = vmatpush2.msra.mxu0 0.0
      %364 = vmatprep.subr.mxu0 0.0
      %365 = vmatpush2.msra.mxu0 0.0
      %366 = vmatprep.subr.mxu0 0.0
      %367 = vmatpush2.msra.mxu0 0.0
      %368 = vmatprep.subr.mxu0 0.0
      %369 = vmatpush2.msra.mxu0 0.0
      %370 = vmatprep.subr.mxu0 0.0
      %371 = vmatpush2.msra.mxu0 0.0
      %372 = vmatprep.subr.mxu0 0.0
      %373 = vmatpush2.msra.mxu0 0.0
      %374 = vmatprep.mubr.f32.mxu0 0.0
      %375 = vmatmul.mubr.f32.gmra.mxu0 %v259
      %v376 = vpop.f32.mrf.mxu0
      %v377 = vadd.f32 %v255, %v376
      %v378 = vpop.f32.mrf.mxu0
      %379 = vmatprep.mubr.f32.mxu0 0.0
      %380 = vmatmul.mubr.f32.gmra.mxu0 %v262
      %v381 = vpop.f32.mrf.mxu0
      %v382 = vadd.f32 %v255, %v381
      %v383 = vpop.f32.mrf.mxu0
      %384 = vmatprep.mubr.f32.mxu0 0.0
      %385 = vmatmul.mubr.f32.gmra.mxu0 %v265
      %v386 = vpop.f32.mrf.mxu0
      %v387 = vadd.f32 %v255, %v386
      %v388 = vpop.f32.mrf.mxu0
      %389 = vmatprep.mubr.f32.mxu0 0.0
      %390 = vmatmul.mubr.f32.gmra.mxu0 %v268
      %v391 = vpop.f32.mrf.mxu0
      %v392 = vadd.f32 %v255, %v391
      %v393 = vpop.f32.mrf.mxu0
      %394 = vmatprep.mubr.f32.mxu0 0.0
      %395 = vmatmul.mubr.f32.gmra.mxu0 %v271
      %v396 = vpop.f32.mrf.mxu0
      %v397 = vadd.f32 %v255, %v396
      %v398 = vpop.f32.mrf.mxu0
      %399 = vmatprep.mubr.f32.mxu0 0.0
      %400 = vmatmul.mubr.f32.gmra.mxu0 %v274
      %v401 = vpop.f32.mrf.mxu0
      %v402 = vadd.f32 %v255, %v401
      %v403 = vpop.f32.mrf.mxu0
      %404 = vmatprep.mubr.f32.mxu0 0.0
      %405 = vmatmul.mubr.f32.gmra.mxu0 %v277
      %v406 = vpop.f32.mrf.mxu0
      %v407 = vadd.f32 %v255, %v406
      %v408 = vpop.f32.mrf.mxu0
      %409 = vmatprep.mubr.f32.mxu0 0.0
      %410 = vmatmul.mubr.f32.gmra.mxu0 %v280
      %v411 = vpop.f32.mrf.mxu0
      %v412 = vadd.f32 %v255, %v411
      %v413 = vpop.f32.mrf.mxu0
      %414 = vmatprep.mubr.f32.mxu0 0.0
      %415 = vmatmul.mubr.f32.gmra.mxu0 %v283
      %v416 = vpop.f32.mrf.mxu0
      %v417 = vadd.f32 %v255, %v416
      %v418 = vpop.f32.mrf.mxu0
      %419 = vmatprep.mubr.f32.mxu0 0.0
      %420 = vmatmul.mubr.f32.gmra.mxu0 %v286
      %v421 = vpop.f32.mrf.mxu0
      %v422 = vadd.f32 %v255, %v421
      %v423 = vpop.f32.mrf.mxu0
      %424 = vmatprep.mubr.f32.mxu0 0.0
      %425 = vmatmul.mubr.f32.gmra.mxu0 %v289
      %v426 = vpop.f32.mrf.mxu0
      %v427 = vadd.f32 %v255, %v426
      %v428 = vpop.f32.mrf.mxu0
      %429 = vmatprep.mubr.f32.mxu0 0.0
      %430 = vmatmul.mubr.f32.gmra.mxu0 %v292
      %v431 = vpop.f32.mrf.mxu0
      %v432 = vadd.f32 %v255, %v431
      %v433 = vpop.f32.mrf.mxu0
      %434 = vmatprep.mubr.f32.mxu0 0.0
      %435 = vmatmul.mubr.f32.gmra.mxu0 %v295
      %v436 = vpop.f32.mrf.mxu0
      %v437 = vadd.f32 %v255, %v436
      %v438 = vpop.f32.mrf.mxu0
      %439 = vmatprep.mubr.f32.mxu0 0.0
      %440 = vmatmul.mubr.f32.gmra.mxu0 %v298
      %v441 = vpop.f32.mrf.mxu0
      %v442 = vadd.f32 %v255, %v441
      %v443 = vpop.f32.mrf.mxu0
      %444 = vmatprep.mubr.f32.mxu0 0.0
      %445 = vmatmul.mubr.f32.gmra.mxu0 %v301
      %v446 = vpop.f32.mrf.mxu0
      %v447 = vadd.f32 %v255, %v446
      %v448 = vpop.f32.mrf.mxu0
      %449 = vmatprep.mubr.f32.mxu0 0.0
      %450 = vmatmul.mubr.f32.gmra.mxu0 %v304
      %v451 = vpop.f32.mrf.mxu0
      %v452 = vadd.f32 %v255, %v451
      %v453 = vpop.f32.mrf.mxu0
      %454 = vdwg.mxu0
      %v455 = vmax.f32 %v377, 0.0
      %v456 = vmax.f32 %v382, 0.0
      %v457 = vmax.f32 %v387, 0.0
      %v458 = vmax.f32 %v392, 0.0
      %v459 = vmax.f32 %v397, 0.0
      %v460 = vmax.f32 %v402, 0.0
      %v461 = vmax.f32 %v407, 0.0
      %v462 = vmax.f32 %v412, 0.0
      %v463 = vmax.f32 %v417, 0.0
      %v464 = vmax.f32 %v422, 0.0
      %v465 = vmax.f32 %v427, 0.0
      %v466 = vmax.f32 %v432, 0.0
      %v467 = vmax.f32 %v437, 0.0
      %v468 = vmax.f32 %v442, 0.0
      %v469 = vmax.f32 %v447, 0.0
      %v470 = vmax.f32 %v452, 0.0
      %471 = vst [vmem:[%s221] sm:$0xff] %v455
      %472 = vst [vmem:[%s221 + $0x8] sm:$0xff] %v456
      %473 = vst [vmem:[%s221 + $0x10] sm:$0xff] %v457
      %474 = vst [vmem:[%s221 + $0x18] sm:$0xff] %v458
      %475 = vst [vmem:[%s221 + $0x20] sm:$0xff] %v459
      %476 = vst [vmem:[%s221 + $0x28] sm:$0xff] %v460
      %477 = vst [vmem:[%s221 + $0x30] sm:$0xff] %v461
      %478 = vst [vmem:[%s221 + $0x38] sm:$0xff] %v462
      %479 = vst [vmem:[%s221 + $0x40] sm:$0xff] %v463
      %480 = vst [vmem:[%s221 + $0x48] sm:$0xff] %v464
      %481 = vst [vmem:[%s221 + $0x50] sm:$0xff] %v465
      %482 = vst [vmem:[%s221 + $0x58] sm:$0xff] %v466
      %483 = vst [vmem:[%s221 + $0x60] sm:$0xff] %v467
      %484 = vst [vmem:[%s221 + $0x68] sm:$0xff] %v468
      %485 = vst [vmem:[%s221 + $0x70] sm:$0xff] %v469
      %486 = vst [vmem:[%s221 + $0x78] sm:$0xff] %v470
      %s487 = smul.u32 %s17, 128
      %v488 = vlaneseq
      %v489 = vshrl.u32 %v488, 7
      %v490 = vadd.s32 %v489, 8
      %v491 = vadd.s32 %v489, 16
      %v492 = vadd.s32 %v489, 24
      %v493 = vadd.s32 %v489, 32
      %v494 = vadd.s32 %v489, 40
      %v495 = vadd.s32 %v489, 48
      %v496 = vadd.s32 %v489, 56
      %v497 = vadd.s32 %v489, 64
      %v498 = vadd.s32 %v489, 72
      %v499 = vadd.s32 %v489, 80
      %v500 = vadd.s32 %v489, 88
      %v501 = vadd.s32 %v489, 96
      %v502 = vadd.s32 %v489, 104
      %v503 = vadd.s32 %v489, 112
      %v504 = vadd.s32 %v489, 120
      %v505 = vstv %s487
      %v506 = vadd.s32 %v505, %v489
      %v507 = vadd.s32 %v505, %v490
      %v508 = vadd.s32 %v505, %v491
      %v509 = vadd.s32 %v505, %v492
      %v510 = vadd.s32 %v505, %v493
      %v511 = vadd.s32 %v505, %v494
      %v512 = vadd.s32 %v505, %v495
      %v513 = vadd.s32 %v505, %v496
      %v514 = vadd.s32 %v505, %v497
      %v515 = vadd.s32 %v505, %v498
      %v516 = vadd.s32 %v505, %v499
      %v517 = vadd.s32 %v505, %v500
      %v518 = vadd.s32 %v505, %v501
      %v519 = vadd.s32 %v505, %v502
      %v520 = vadd.s32 %v505, %v503
      %v521 = vadd.s32 %v505, %v504
      %vm522 = vcmp.lt.s32.totalorder %v506, 512
      %vm523 = vcmp.lt.s32.totalorder %v507, 512
      %vm524 = vcmp.lt.s32.totalorder %v508, 512
      %vm525 = vcmp.lt.s32.totalorder %v509, 512
      %vm526 = vcmp.lt.s32.totalorder %v510, 512
      %vm527 = vcmp.lt.s32.totalorder %v511, 512
      %vm528 = vcmp.lt.s32.totalorder %v512, 512
      %vm529 = vcmp.lt.s32.totalorder %v513, 512
      %vm530 = vcmp.lt.s32.totalorder %v514, 512
      %vm531 = vcmp.lt.s32.totalorder %v515, 512
      %vm532 = vcmp.lt.s32.totalorder %v516, 512
      %vm533 = vcmp.lt.s32.totalorder %v517, 512
      %vm534 = vcmp.lt.s32.totalorder %v518, 512
      %vm535 = vcmp.lt.s32.totalorder %v519, 512
      %vm536 = vcmp.lt.s32.totalorder %v520, 512
      %vm537 = vcmp.lt.s32.totalorder %v521, 512
      %v538 = vsel %vm522, 1, 0
      %v539 = vsel %vm523, 1, 0
      %v540 = vsel %vm524, 1, 0
      %v541 = vsel %vm525, 1, 0
      %v542 = vsel %vm526, 1, 0
      %v543 = vsel %vm527, 1, 0
      %v544 = vsel %vm528, 1, 0
      %v545 = vsel %vm529, 1, 0
      %v546 = vsel %vm530, 1, 0
      %v547 = vsel %vm531, 1, 0
      %v548 = vsel %vm532, 1, 0
      %v549 = vsel %vm533, 1, 0
      %v550 = vsel %vm534, 1, 0
      %v551 = vsel %vm535, 1, 0
      %v552 = vsel %vm536, 1, 0
      %v553 = vsel %vm537, 1, 0
      %vm554 = vcmp.eq.s32.totalorder %v538, 1
      %vm555 = vcmp.eq.s32.totalorder %v539, 1
      %vm556 = vcmp.eq.s32.totalorder %v540, 1
      %vm557 = vcmp.eq.s32.totalorder %v541, 1
      %vm558 = vcmp.eq.s32.totalorder %v542, 1
      %vm559 = vcmp.eq.s32.totalorder %v543, 1
      %vm560 = vcmp.eq.s32.totalorder %v544, 1
      %vm561 = vcmp.eq.s32.totalorder %v545, 1
      %vm562 = vcmp.eq.s32.totalorder %v546, 1
      %vm563 = vcmp.eq.s32.totalorder %v547, 1
      %vm564 = vcmp.eq.s32.totalorder %v548, 1
      %vm565 = vcmp.eq.s32.totalorder %v549, 1
      %vm566 = vcmp.eq.s32.totalorder %v550, 1
      %vm567 = vcmp.eq.s32.totalorder %v551, 1
      %vm568 = vcmp.eq.s32.totalorder %v552, 1
      %vm569 = vcmp.eq.s32.totalorder %v553, 1
      %v570 = vsel %vm554, %v455, 0.0
      %v571 = vsel %vm555, %v456, 0.0
      %v572 = vsel %vm556, %v457, 0.0
      %v573 = vsel %vm557, %v458, 0.0
      %v574 = vsel %vm558, %v459, 0.0
      %v575 = vsel %vm559, %v460, 0.0
      %v576 = vsel %vm560, %v461, 0.0
      %v577 = vsel %vm561, %v462, 0.0
      %v578 = vsel %vm562, %v463, 0.0
      %v579 = vsel %vm563, %v464, 0.0
      %v580 = vsel %vm564, %v465, 0.0
      %v581 = vsel %vm565, %v466, 0.0
      %v582 = vsel %vm566, %v467, 0.0
      %v583 = vsel %vm567, %v468, 0.0
      %v584 = vsel %vm568, %v469, 0.0
      %v585 = vsel %vm569, %v470, 0.0
      %v586 = vld [vmem:[%s4] sm:$0x1]
      %v587 = vadd.f32 %v570, %v571
      %v588 = vadd.f32 %v587, %v572
      %v589 = vadd.f32 %v588, %v573
      %v590 = vadd.f32 %v589, %v574
      %v591 = vadd.f32 %v590, %v575
      %v592 = vadd.f32 %v591, %v576
      %v593 = vadd.f32 %v592, %v577
      %v594 = vadd.f32 %v593, %v578
      %v595 = vadd.f32 %v594, %v579
      %v596 = vadd.f32 %v595, %v580
      %v597 = vadd.f32 %v596, %v581
      %v598 = vadd.f32 %v597, %v582
      %v599 = vadd.f32 %v598, %v583
      %v600 = vadd.f32 %v599, %v584
      %v601 = vadd.f32 %v600, %v585
      %v602 = vrot.slane %v601, 4
      %v603 = vadd.f32 %v601, %v602
      %v604 = vrot.slane %v603, 2
      %v605 = vadd.f32 %v603, %v604
      %v606 = vrot.slane %v605, 1
      %v607 = vadd.f32 %v605, %v606
      %v608 = vadd.f32 %v586, %v607
      %609 = vst [vmem:[%s4] sm:$0x1] %v608
      %v610 = vld [vmem:[%s5] sm:$0x1]
      %v611 = vmul.f32 %v570, %v570
      %v612 = vmul.f32 %v571, %v571
      %v613 = vmul.f32 %v572, %v572
      %v614 = vmul.f32 %v573, %v573
      %v615 = vmul.f32 %v574, %v574
      %v616 = vmul.f32 %v575, %v575
      %v617 = vmul.f32 %v576, %v576
      %v618 = vmul.f32 %v577, %v577
      %v619 = vmul.f32 %v578, %v578
      %v620 = vmul.f32 %v579, %v579
      %v621 = vmul.f32 %v580, %v580
      %v622 = vmul.f32 %v581, %v581
      %v623 = vmul.f32 %v582, %v582
      %v624 = vmul.f32 %v583, %v583
      %v625 = vmul.f32 %v584, %v584
      %v626 = vmul.f32 %v585, %v585
      %v627 = vadd.f32 %v611, %v612
      %v628 = vadd.f32 %v627, %v613
      %v629 = vadd.f32 %v628, %v614
      %v630 = vadd.f32 %v629, %v615
      %v631 = vadd.f32 %v630, %v616
      %v632 = vadd.f32 %v631, %v617
      %v633 = vadd.f32 %v632, %v618
      %v634 = vadd.f32 %v633, %v619
      %v635 = vadd.f32 %v634, %v620
      %v636 = vadd.f32 %v635, %v621
      %v637 = vadd.f32 %v636, %v622
      %v638 = vadd.f32 %v637, %v623
      %v639 = vadd.f32 %v638, %v624
      %v640 = vadd.f32 %v639, %v625
      %v641 = vadd.f32 %v640, %v626
      %v642 = vrot.slane %v641, 4
      %v643 = vadd.f32 %v641, %v642
      %v644 = vrot.slane %v643, 2
      %v645 = vadd.f32 %v643, %v644
      %v646 = vrot.slane %v645, 1
      %v647 = vadd.f32 %v645, %v646
      %v648 = vadd.f32 %v610, %v647
      %649 = vst [vmem:[%s5] sm:$0x1] %v648
      %s650 = smul.u32 16, %s17
      %p651 = scmp.lt.s32.totalorder %s650, 63
      %s652 = scalar_select %p651, %s650, 63
      %s653 = smul.addr %s652, 8
      %s654 = scalar_lea.vmem %s3, %s653
      // Predicated region
      $region37: #{conv2d_relu_bn.2} parent=31 // pred_check
        %p655 = pneg %p103
      $region38: #{conv2d_relu_bn.2} parent=31 // pred_check_branch
        %657 = sbr.rel (%p655) target = $region40
      $region39: #{conv2d_relu_bn.2} parent=31 // pred_region
        %s658 = smul.u32 16, %s17
      $region40: #{conv2d_relu_bn.2} parent=31 // pred_fallthru
        _
      // Predicated region
      $region41: #{conv2d_relu_bn.2} parent=31 // pred_check
        %p659 = pneg %p124
      $region42: #{conv2d_relu_bn.2} parent=31 // pred_check_branch
        %661 = sbr.rel (%p659) target = $region44
      $region43: #{conv2d_relu_bn.2} parent=31 // pred_region
        _
      $region44: #{conv2d_relu_bn.2} parent=31 // pred_fallthru
        _
      // Predicated region
      $region45: #{conv2d_relu_bn.2} parent=31 // pred_check
        %p662 = pneg %p145
      $region46: #{conv2d_relu_bn.2} parent=31 // pred_check_branch
        %664 = sbr.rel (%p662) target = $region48
      $region47: #{conv2d_relu_bn.2} parent=31 // pred_region
        _
      $region48: #{conv2d_relu_bn.2} parent=31 // pred_fallthru
        _
      // Predicated region
      $region49: #{conv2d_relu_bn.2} parent=31 // pred_check
        %p665 = pneg %p124
      $region50: #{conv2d_relu_bn.2} parent=31 // pred_check_branch
        %667 = sbr.rel (%p665) target = $region52
      $region51: #{conv2d_relu_bn.2} parent=31 // pred_region
        _
      $region52: #{conv2d_relu_bn.2} parent=31 // pred_fallthru
        _
      // Predicated region
      $region53: #{conv2d_relu_bn.2} parent=31 // pred_check
        %p668 = pneg %p145
      $region54: #{conv2d_relu_bn.2} parent=31 // pred_check_branch
        %670 = sbr.rel (%p668) target = $region56
      $region55: #{conv2d_relu_bn.2} parent=31 // pred_region
        _
      $region56: #{conv2d_relu_bn.2} parent=31 // pred_fallthru
        _
    $region32: #{conv2d_relu_bn.2} parent=5 // pred_fallthru
      _
    %p671 = scmp.le.s32.totalorder 2, %s12
    // Predicated region
    $region57: #{conv2d_relu_bn.2} parent=5 // pred_check
      %p672 = pneg %p671
    $region58: #{conv2d_relu_bn.2} parent=5 // pred_check_branch
      %674 = sbr.rel (%p672) target = $region60
    $region59: #{conv2d_relu_bn.2} parent=5 // pred_region
      %s675 = ssub.s32 %s12, 2
      // Predicated region
      $region61: #{conv2d_relu_bn.2} parent=59 // pred_check
        %p676 = pneg %p109
      $region62: #{conv2d_relu_bn.2} parent=59 // pred_check_branch
        %678 = sbr.rel (%p676) target = $region64
      $region63: #{conv2d_relu_bn.2} parent=59 // pred_region
        %s679 = smul.u32 16, %s18
        %p680 = scmp.lt.s32.totalorder %s679, 63
        %s681 = scalar_select %p680, %s679, 63
        %s682 = smul.addr %s681, 8
        %s683 = scalar_lea.vmem %s3, %s682
      $region64: #{conv2d_relu_bn.2} parent=59 // pred_fallthru
        _
    $region60: #{conv2d_relu_bn.2} parent=5 // pred_fallthru
      _
  $region6: #{conv2d_relu_bn.2} parent=0 // loop_footer
    %s16 = sadd.s32 1, %s12
  $region7: #{conv2d_relu_bn.2} parent=0 // loop_footer_branch
    %11 = sbr.rel target = $region3
  $region8: #{conv2d_relu_bn.2} parent=0 // loop_exit
    _

</llo_original>
